<compile_context>
chip_gen: v5e
topology: v5e:2x2
jax: 0.10.0
libtpu: 0.0.40
codegen_flags: <defaults>
</compile_context>

<pallas_src>
import functools

import jax
import jax.numpy as jnp
import numpy as np
from jax.experimental import pallas as pl
from jax.experimental.pallas import tpu as pltpu

EPS = 1e-5
LRELU_SLOPE = 0.2
LANE = 128


def _round_up(x, m):
    return (x + m - 1) // m * m


def _vmem_limit(block_bytes):
    # generous floor, conservative cap (v7x physical VMEM is 64 MiB / core)
    return int(min(48 * 1024 * 1024, max(16 * 1024 * 1024, 2 * block_bytes)))


# ---------------------------------------------------------------------------
# In-kernel helper: InstanceNorm2d(affine=False, eps=1e-5) + LeakyReLU(0.2),
# one-pass statistics (var = E[y^2] - mean^2), all in f32.
# ---------------------------------------------------------------------------
def _instance_norm_lrelu(y, batch, pos):
    # y: (batch*pos, C) f32  ->  (batch, pos, C) f32
    y = y.reshape(batch, pos, -1)                     # free split on 8-row boundary
    mean = jnp.mean(y, axis=1, keepdims=True)
    var = jnp.mean(y * y, axis=1, keepdims=True) - mean * mean
    var = jnp.maximum(var, 0.0)
    yn = (y - mean) * jax.lax.rsqrt(var + EPS)
    return jnp.where(yn >= 0, yn, LRELU_SLOPE * yn)


# ---------------------------------------------------------------------------
# Kernel 1: intermediate Conv2d(3x3, s=2) + bias + InstanceNorm + LeakyReLU.
#   p_ref: (B*P, Kp) bf16   w_ref: (Kp, C) bf16   b_ref: (1, C) f32
#   o_ref: (B, P, C) bf16
# ---------------------------------------------------------------------------
def conv_in_lrelu_kernel(p_ref, w_ref, b_ref, o_ref, *, batch, pos):
    y = jnp.dot(p_ref[...], w_ref[...], preferred_element_type=jnp.float32)
    y = y + b_ref[...]
    act = _instance_norm_lrelu(y, batch, pos)
    o_ref[...] = act.astype(o_ref.dtype)


# ---------------------------------------------------------------------------
# Kernel 2: final 3x3 conv + IN + LReLU, then 1x1 conv + IN + LReLU, then
# AdaptiveAvgPool2d((1,1)) -- all fused, output (B, 1, C3) f32.
# ---------------------------------------------------------------------------
def final_block_kernel(p_ref, w2_ref, b2_ref, w3_ref, b3_ref, o_ref, *, batch, pos):
    y = jnp.dot(p_ref[...], w2_ref[...], preferred_element_type=jnp.float32)
    y = y + b2_ref[...]
    a2 = _instance_norm_lrelu(y, batch, pos)                   # (B, P, C2) f32

    a2_2d = a2.reshape(batch * pos, -1).astype(w3_ref.dtype)   # bf16 for MXU
    z = jnp.dot(a2_2d, w3_ref[...], preferred_element_type=jnp.float32)
    z = z + b3_ref[...]
    a3 = _instance_norm_lrelu(z, batch, pos)                   # (B, P, C3) f32

    o_ref[...] = jnp.mean(a3, axis=1, keepdims=True)           # global avg pool


# ---------------------------------------------------------------------------
# Plain-JAX glue (cheap layout work only; allowed to fuse into the kernels).
# ---------------------------------------------------------------------------
def _im2col(x, k, stride, pad):
    # x: (B, H, W, C) -> (B, Ho*Wo, k*k*C), tap order (kh, kw, c)
    B, H, W, C = x.shape
    Ho = (H + 2 * pad - k) // stride + 1
    Wo = (W + 2 * pad - k) // stride + 1
    if pad:
        x = jnp.pad(x, ((0, 0), (pad, pad), (pad, pad), (0, 0)))
    cols = []
    for i in range(k):
        for j in range(k):
            cols.append(x[:, i:i + stride * Ho:stride, j:j + stride * Wo:stride, :])
    patches = jnp.concatenate(cols, axis=-1)
    return patches.reshape(B, Ho * Wo, k * k * C), Ho, Wo


def _prep_patches(x, k, stride, pad):
    patches, Ho, Wo = _im2col(x, k, stride, pad)
    B, P, K = patches.shape
    Kp = _round_up(K, LANE)
    patches = jnp.pad(patches, ((0, 0), (0, 0), (0, Kp - K)))
    p2d = patches.reshape(B * P, Kp).astype(jnp.bfloat16)
    return p2d, Ho, Wo, P, K, Kp


def _prep_weight(w, k_pad):
    # (Cout, Cin, KH, KW) -> (KH*KW*Cin, Cout), matching im2col order; K zero-padded.
    Cout, Cin, KH, KW = w.shape
    w_mat = jnp.transpose(w, (2, 3, 1, 0)).reshape(KH * KW * Cin, Cout)
    w_mat = jnp.pad(w_mat, ((0, k_pad - KH * KW * Cin), (0, 0)))
    return w_mat.astype(jnp.bfloat16)


# ---------------------------------------------------------------------------
# Layer wrappers.
# ---------------------------------------------------------------------------
def conv3x3_in_lrelu(x, w, b):
    B = x.shape[0]
    Cout = w.shape[0]
    p2d, Ho, Wo, P, K, Kp = _prep_patches(x, 3, stride=2, pad=1)
    w_mat = _prep_weight(w, Kp)
    b_mat = b.reshape(1, Cout).astype(jnp.float32)

    block_bytes = (B * P * Kp + Kp * Cout + B * P * Cout) * 2 + Cout * 4
    out = pl.pallas_call(
        functools.partial(conv_in_lrelu_kernel, batch=B, pos=P),
        grid=(1,),
        in_specs=[
            pl.BlockSpec((B * P, Kp), lambda i: (0, 0)),
            pl.BlockSpec((Kp, Cout), lambda i: (0, 0)),
            pl.BlockSpec((1, Cout), lambda i: (0, 0)),
        ],
        out_specs=pl.BlockSpec((B, P, Cout), lambda i: (0, 0, 0)),
        out_shape=jax.ShapeDtypeStruct((B, P, Cout), jnp.bfloat16),
        compiler_params=pltpu.CompilerParams(
            dimension_semantics=("arbitrary",),
            vmem_limit_bytes=_vmem_limit(block_bytes),
            allow_input_fusion=[True, False, False],
        ),
        cost_estimate=pl.CostEstimate(
            flops=2 * B * P * Kp * Cout,
            transcendentals=0,
            bytes_accessed=block_bytes,
        ),
    )(p2d, w_mat, b_mat)
    return out.reshape(B, Ho, Wo, Cout)


def final_fused_block(x, w2, b2, w3, b3):
    B = x.shape[0]
    C2 = w2.shape[0]
    C3 = w3.shape[0]
    p2d, Ho, Wo, P, K, Kp = _prep_patches(x, 3, stride=2, pad=1)
    w2_mat = _prep_weight(w2, Kp)
    b2_mat = b2.reshape(1, C2).astype(jnp.float32)
    w3_mat = jnp.transpose(w3, (2, 3, 1, 0)).reshape(C2, C3).astype(jnp.bfloat16)
    b3_mat = b3.reshape(1, C3).astype(jnp.float32)

    block_bytes = ((B * P * Kp + Kp * C2 + C2 * C3) * 2
                   + (C2 + C3 + B * C3) * 4)
    flops = 2 * B * P * Kp * C2 + 2 * B * P * C2 * C3
    out = pl.pallas_call(
        functools.partial(final_block_kernel, batch=B, pos=P),
        grid=(1,),
        in_specs=[
            pl.BlockSpec((B * P, Kp), lambda i: (0, 0)),
            pl.BlockSpec((Kp, C2), lambda i: (0, 0)),
            pl.BlockSpec((1, C2), lambda i: (0, 0)),
            pl.BlockSpec((C2, C3), lambda i: (0, 0)),
            pl.BlockSpec((1, C3), lambda i: (0, 0)),
        ],
        out_specs=pl.BlockSpec((B, 1, C3), lambda i: (0, 0, 0)),
        out_shape=jax.ShapeDtypeStruct((B, 1, C3), jnp.float32),
        compiler_params=pltpu.CompilerParams(
            dimension_semantics=("arbitrary",),
            vmem_limit_bytes=_vmem_limit(block_bytes),
            allow_input_fusion=[True, False, False, False, False],
        ),
        cost_estimate=pl.CostEstimate(
            flops=flops,
            transcendentals=0,
            bytes_accessed=block_bytes,
        ),
    )(p2d, w2_mat, b2_mat, w3_mat, b3_mat)
    return out.reshape(B, C3)


# ---------------------------------------------------------------------------
# StyleEncodeBlock: parameter construction + forward.
# ---------------------------------------------------------------------------
def make_params(in_channels, out_channels, in_size, key):
    min_channel = 64
    max_channel = out_channels
    repeat_num = int(np.log2(in_size)) - 3

    layer_cfg = [(in_channels, min_channel, 3)]      # (cin, cout, k); k=3 => stride 2
    cin = min_channel
    cout = min(cin * 2, max_channel)
    for _ in range(repeat_num):
        layer_cfg.append((cin, cout, 3))
        cin = cout
        cout = min(cin * 2, max_channel)
    layer_cfg.append((cin, max_channel, 1))          # final 1x1, stride 1

    params = []
    for (ci, co, k) in layer_cfg:
        key, kw_key, kb_key = jax.random.split(key, 3)
        w = jax.random.normal(kw_key, (co, ci, k, k), jnp.float32) * 0.05
        b = jax.random.normal(kb_key, (co,), jnp.float32) * 0.05
        params.append((w, b))
    return params


@jax.jit
def style_encode_block_forward(x_nchw, params):
    # params: list of (w, b); all but the last are 3x3 stride-2 convs, last is 1x1.
    x = jnp.transpose(x_nchw, (0, 2, 3, 1)).astype(jnp.float32)   # NCHW -> NHWC
    n = len(params)
    for (w, b) in params[:n - 2]:
        x = conv3x3_in_lrelu(x, w, b)
    (w2, b2), (w3, b3) = params[n - 2], params[n - 1]
    return final_fused_block(x, w2, b2, w3, b3)      # (B, max_channel) f32


if __name__ == "__main__":
    B, Cin, in_size = 2, 4, 16
    out_channels = 128

    key = jax.random.PRNGKey(0)
    key, xk = jax.random.split(key)
    x = jax.random.normal(xk, (B, Cin, in_size, in_size), jnp.float32)

    params = make_params(Cin, out_channels, in_size, key)

    y = style_encode_block_forward(x, params)
    y = jax.block_until_ready(y)

    assert y.shape == (B, out_channels), y.shape
    assert bool(jnp.all(jnp.isfinite(y)))
    print("KERNEL_OK")
</pallas_src>

<mosaic_0001>
module attributes {stable_mosaic.version = 11 : i64} {
  func.func @conv_in_lrelu_kernel(%arg0: i32, %arg1: memref<128x128xbf16, #tpu.memory_space<vmem>>, %arg2: memref<128x64xbf16, #tpu.memory_space<vmem>>, %arg3: memref<1x64xf32, #tpu.memory_space<vmem>>, %arg4: memref<2x64x64xbf16, #tpu.memory_space<vmem>>) attributes {dimension_semantics = [#tpu.dimension_semantics<arbitrary>], iteration_bounds = array<i64: 1>, scalar_prefetch = 0 : i64, scratch_operands = 0 : i64, tpu.core_type = #tpu.core_type<tc>, window_params = [{pipeline_mode = #tpu.pipeline_mode<synchronous>, transform_indices = @transform_0, window_bounds = array<i64: 128, 128>}, {pipeline_mode = #tpu.pipeline_mode<synchronous>, transform_indices = @transform_1, window_bounds = array<i64: 128, 64>}, {pipeline_mode = #tpu.pipeline_mode<synchronous>, transform_indices = @transform_2, window_bounds = array<i64: 1, 64>}, {pipeline_mode = #tpu.pipeline_mode<synchronous>, transform_indices = @transform_3, window_bounds = array<i64: 2, 64, 64>}]} {
    %c0 = arith.constant 0 : index
    %c0_0 = arith.constant 0 : index
    %0 = vector.load %arg1[%c0, %c0_0] : memref<128x128xbf16, #tpu.memory_space<vmem>>, vector<128x128xbf16>
    %c0_1 = arith.constant 0 : index
    %c0_2 = arith.constant 0 : index
    %1 = vector.load %arg2[%c0_1, %c0_2] : memref<128x64xbf16, #tpu.memory_space<vmem>>, vector<128x64xbf16>
    %cst = arith.constant dense<0.000000e+00> : vector<128x64xf32>
    %2 = tpu.matmul %0, %1, %cst {dimension_numbers = #tpu.dot_dimension_numbers<[1], [0], [0], [1], [0, 0, 1, 1], [], []>} : vector<128x128xbf16>, vector<128x64xbf16>, vector<128x64xf32> -> vector<128x64xf32>
    %c0_3 = arith.constant 0 : index
    %c0_4 = arith.constant 0 : index
    %3 = vector.load %arg3[%c0_3, %c0_4] : memref<1x64xf32, #tpu.memory_space<vmem>>, vector<1x64xf32>
    %4 = vector.broadcast %3 : vector<1x64xf32> to vector<128x64xf32>
    %5 = arith.addf %2, %4 : vector<128x64xf32>
    %6 = vector.shape_cast %5 : vector<128x64xf32> to vector<2x64x64xf32>
    %cst_5 = arith.constant dense<0.000000e+00> : vector<2x64xf32>
    %7 = vector.multi_reduction <add>, %6, %cst_5 [1] : vector<2x64x64xf32> to vector<2x64xf32>
    %8 = vector.shape_cast %7 : vector<2x64xf32> to vector<2x1x64xf32>
    %cst_6 = arith.constant 6.400000e+01 : f32
    %9 = vector.broadcast %cst_6 : f32 to vector<2x1x64xf32>
    %10 = arith.divf %8, %9 : vector<2x1x64xf32>
    %11 = arith.mulf %6, %6 : vector<2x64x64xf32>
    %cst_7 = arith.constant dense<0.000000e+00> : vector<2x64xf32>
    %12 = vector.multi_reduction <add>, %11, %cst_7 [1] : vector<2x64x64xf32> to vector<2x64xf32>
    %13 = vector.shape_cast %12 : vector<2x64xf32> to vector<2x1x64xf32>
    %cst_8 = arith.constant 6.400000e+01 : f32
    %14 = vector.broadcast %cst_8 : f32 to vector<2x1x64xf32>
    %15 = arith.divf %13, %14 : vector<2x1x64xf32>
    %16 = arith.mulf %10, %10 : vector<2x1x64xf32>
    %17 = arith.subf %15, %16 : vector<2x1x64xf32>
    %cst_9 = arith.constant 0.000000e+00 : f32
    %18 = vector.broadcast %cst_9 : f32 to vector<2x1x64xf32>
    %19 = arith.maximumf %17, %18 : vector<2x1x64xf32>
    %20 = vector.broadcast %10 : vector<2x1x64xf32> to vector<2x64x64xf32>
    %21 = arith.subf %6, %20 : vector<2x64x64xf32>
    %cst_10 = arith.constant 9.99999974E-6 : f32
    %22 = vector.broadcast %cst_10 : f32 to vector<2x1x64xf32>
    %23 = arith.addf %19, %22 : vector<2x1x64xf32>
    %24 = math.rsqrt %23 : vector<2x1x64xf32>
    %25 = vector.broadcast %24 : vector<2x1x64xf32> to vector<2x64x64xf32>
    %26 = arith.mulf %21, %25 : vector<2x64x64xf32>
    %cst_11 = arith.constant 0.000000e+00 : f32
    %27 = vector.broadcast %cst_11 : f32 to vector<2x64x64xf32>
    %28 = arith.cmpf oge, %26, %27 : vector<2x64x64xf32>
    %cst_12 = arith.constant 2.000000e-01 : f32
    %29 = vector.broadcast %cst_12 : f32 to vector<2x64x64xf32>
    %30 = arith.mulf %29, %26 : vector<2x64x64xf32>
    %31 = arith.select %28, %26, %30 : vector<2x64x64xi1>, vector<2x64x64xf32>
    %32 = arith.truncf %31 : vector<2x64x64xf32> to vector<2x64x64xbf16>
    %c0_13 = arith.constant 0 : index
    %c0_14 = arith.constant 0 : index
    %c0_15 = arith.constant 0 : index
    %33 = vector.load %arg4[%c0_13, %c0_14, %c0_15] : memref<2x64x64xbf16, #tpu.memory_space<vmem>>, vector<2x64x64xbf16>
    tpu.vector_store %arg4[%c0_13, %c0_14, %c0_15], %32 {strides = array<i32>} : memref<2x64x64xbf16, #tpu.memory_space<vmem>>, vector<2x64x64xbf16>,
    return
  }
  func.func @transform_0(%arg0: i32) -> (i32, i32) {
    %c0_i32 = arith.constant 0 : i32
    %c0_i32_0 = arith.constant 0 : i32
    %c0_i32_1 = arith.constant 0 : i32
    return %c0_i32, %c0_i32_0 : i32, i32
  }
  func.func @transform_1(%arg0: i32) -> (i32, i32) {
    %c0_i32 = arith.constant 0 : i32
    %c0_i32_0 = arith.constant 0 : i32
    %c0_i32_1 = arith.constant 0 : i32
    return %c0_i32, %c0_i32_0 : i32, i32
  }
  func.func @transform_2(%arg0: i32) -> (i32, i32) {
    %c0_i32 = arith.constant 0 : i32
    %c0_i32_0 = arith.constant 0 : i32
    %c0_i32_1 = arith.constant 0 : i32
    return %c0_i32, %c0_i32_0 : i32, i32
  }
  func.func @transform_3(%arg0: i32) -> (i32, i32, i32) {
    %c0_i32 = arith.constant 0 : i32
    %c0_i32_0 = arith.constant 0 : i32
    %c0_i32_1 = arith.constant 0 : i32
    %c0_i32_2 = arith.constant 0 : i32
    return %c0_i32, %c0_i32_0, %c0_i32_1 : i32, i32, i32
  }
}

module attributes {stable_mosaic.version = 11 : i64} {
  func.func @final_block_kernel(%arg0: i32, %arg1: memref<32x640xbf16, #tpu.memory_space<vmem>>, %arg2: memref<640x128xbf16, #tpu.memory_space<vmem>>, %arg3: memref<1x128xf32, #tpu.memory_space<vmem>>, %arg4: memref<128x128xbf16, #tpu.memory_space<vmem>>, %arg5: memref<1x128xf32, #tpu.memory_space<vmem>>, %arg6: memref<2x1x128xf32, #tpu.memory_space<vmem>>) attributes {dimension_semantics = [#tpu.dimension_semantics<arbitrary>], iteration_bounds = array<i64: 1>, scalar_prefetch = 0 : i64, scratch_operands = 0 : i64, tpu.core_type = #tpu.core_type<tc>, window_params = [{pipeline_mode = #tpu.pipeline_mode<synchronous>, transform_indices = @transform_0, window_bounds = array<i64: 32, 640>}, {pipeline_mode = #tpu.pipeline_mode<synchronous>, transform_indices = @transform_1, window_bounds = array<i64: 640, 128>}, {pipeline_mode = #tpu.pipeline_mode<synchronous>, transform_indices = @transform_2, window_bounds = array<i64: 1, 128>}, {pipeline_mode = #tpu.pipeline_mode<synchronous>, transform_indices = @transform_3, window_bounds = array<i64: 128, 128>}, {pipeline_mode = #tpu.pipeline_mode<synchronous>, transform_indices = @transform_4, window_bounds = array<i64: 1, 128>}, {pipeline_mode = #tpu.pipeline_mode<synchronous>, transform_indices = @transform_5, window_bounds = array<i64: 2, 1, 128>}]} {
    %c0 = arith.constant 0 : index
    %c0_0 = arith.constant 0 : index
    %0 = vector.load %arg1[%c0, %c0_0] : memref<32x640xbf16, #tpu.memory_space<vmem>>, vector<32x640xbf16>
    %c0_1 = arith.constant 0 : index
    %c0_2 = arith.constant 0 : index
    %1 = vector.load %arg2[%c0_1, %c0_2] : memref<640x128xbf16, #tpu.memory_space<vmem>>, vector<640x128xbf16>
    %cst = arith.constant dense<0.000000e+00> : vector<32x128xf32>
    %2 = tpu.matmul %0, %1, %cst {dimension_numbers = #tpu.dot_dimension_numbers<[1], [0], [0], [1], [0, 0, 1, 1], [], []>} : vector<32x640xbf16>, vector<640x128xbf16>, vector<32x128xf32> -> vector<32x128xf32>
    %c0_3 = arith.constant 0 : index
    %c0_4 = arith.constant 0 : index
    %3 = vector.load %arg3[%c0_3, %c0_4] : memref<1x128xf32, #tpu.memory_space<vmem>>, vector<1x128xf32>
    %4 = vector.broadcast %3 : vector<1x128xf32> to vector<32x128xf32>
    %5 = arith.addf %2, %4 : vector<32x128xf32>
    %6 = vector.shape_cast %5 : vector<32x128xf32> to vector<2x16x128xf32>
    %cst_5 = arith.constant dense<0.000000e+00> : vector<2x128xf32>
    %7 = vector.multi_reduction <add>, %6, %cst_5 [1] : vector<2x16x128xf32> to vector<2x128xf32>
    %8 = vector.shape_cast %7 : vector<2x128xf32> to vector<2x1x128xf32>
    %cst_6 = arith.constant 1.600000e+01 : f32
    %9 = vector.broadcast %cst_6 : f32 to vector<2x1x128xf32>
    %10 = arith.divf %8, %9 : vector<2x1x128xf32>
    %11 = arith.mulf %6, %6 : vector<2x16x128xf32>
    %cst_7 = arith.constant dense<0.000000e+00> : vector<2x128xf32>
    %12 = vector.multi_reduction <add>, %11, %cst_7 [1] : vector<2x16x128xf32> to vector<2x128xf32>
    %13 = vector.shape_cast %12 : vector<2x128xf32> to vector<2x1x128xf32>
    %cst_8 = arith.constant 1.600000e+01 : f32
    %14 = vector.broadcast %cst_8 : f32 to vector<2x1x128xf32>
    %15 = arith.divf %13, %14 : vector<2x1x128xf32>
    %16 = arith.mulf %10, %10 : vector<2x1x128xf32>
    %17 = arith.subf %15, %16 : vector<2x1x128xf32>
    %cst_9 = arith.constant 0.000000e+00 : f32
    %18 = vector.broadcast %cst_9 : f32 to vector<2x1x128xf32>
    %19 = arith.maximumf %17, %18 : vector<2x1x128xf32>
    %20 = vector.broadcast %10 : vector<2x1x128xf32> to vector<2x16x128xf32>
    %21 = arith.subf %6, %20 : vector<2x16x128xf32>
    %cst_10 = arith.constant 9.99999974E-6 : f32
    %22 = vector.broadcast %cst_10 : f32 to vector<2x1x128xf32>
    %23 = arith.addf %19, %22 : vector<2x1x128xf32>
    %24 = math.rsqrt %23 : vector<2x1x128xf32>
    %25 = vector.broadcast %24 : vector<2x1x128xf32> to vector<2x16x128xf32>
    %26 = arith.mulf %21, %25 : vector<2x16x128xf32>
    %cst_11 = arith.constant 0.000000e+00 : f32
    %27 = vector.broadcast %cst_11 : f32 to vector<2x16x128xf32>
    %28 = arith.cmpf oge, %26, %27 : vector<2x16x128xf32>
    %cst_12 = arith.constant 2.000000e-01 : f32
    %29 = vector.broadcast %cst_12 : f32 to vector<2x16x128xf32>
    %30 = arith.mulf %29, %26 : vector<2x16x128xf32>
    %31 = arith.select %28, %26, %30 : vector<2x16x128xi1>, vector<2x16x128xf32>
    %32 = vector.shape_cast %31 : vector<2x16x128xf32> to vector<32x128xf32>
    %33 = arith.truncf %32 : vector<32x128xf32> to vector<32x128xbf16>
    %c0_13 = arith.constant 0 : index
    %c0_14 = arith.constant 0 : index
    %34 = vector.load %arg4[%c0_13, %c0_14] : memref<128x128xbf16, #tpu.memory_space<vmem>>, vector<128x128xbf16>
    %cst_15 = arith.constant dense<0.000000e+00> : vector<32x128xf32>
    %35 = tpu.matmul %33, %34, %cst_15 {dimension_numbers = #tpu.dot_dimension_numbers<[1], [0], [0], [1], [0, 0, 1, 1], [], []>} : vector<32x128xbf16>, vector<128x128xbf16>, vector<32x128xf32> -> vector<32x128xf32>
    %c0_16 = arith.constant 0 : index
    %c0_17 = arith.constant 0 : index
    %36 = vector.load %arg5[%c0_16, %c0_17] : memref<1x128xf32, #tpu.memory_space<vmem>>, vector<1x128xf32>
    %37 = vector.broadcast %36 : vector<1x128xf32> to vector<32x128xf32>
    %38 = arith.addf %35, %37 : vector<32x128xf32>
    %39 = vector.shape_cast %38 : vector<32x128xf32> to vector<2x16x128xf32>
    %cst_18 = arith.constant dense<0.000000e+00> : vector<2x128xf32>
    %40 = vector.multi_reduction <add>, %39, %cst_18 [1] : vector<2x16x128xf32> to vector<2x128xf32>
    %41 = vector.shape_cast %40 : vector<2x128xf32> to vector<2x1x128xf32>
    %cst_19 = arith.constant 1.600000e+01 : f32
    %42 = vector.broadcast %cst_19 : f32 to vector<2x1x128xf32>
    %43 = arith.divf %41, %42 : vector<2x1x128xf32>
    %44 = arith.mulf %39, %39 : vector<2x16x128xf32>
    %cst_20 = arith.constant dense<0.000000e+00> : vector<2x128xf32>
    %45 = vector.multi_reduction <add>, %44, %cst_20 [1] : vector<2x16x128xf32> to vector<2x128xf32>
    %46 = vector.shape_cast %45 : vector<2x128xf32> to vector<2x1x128xf32>
    %cst_21 = arith.constant 1.600000e+01 : f32
    %47 = vector.broadcast %cst_21 : f32 to vector<2x1x128xf32>
    %48 = arith.divf %46, %47 : vector<2x1x128xf32>
    %49 = arith.mulf %43, %43 : vector<2x1x128xf32>
    %50 = arith.subf %48, %49 : vector<2x1x128xf32>
    %cst_22 = arith.constant 0.000000e+00 : f32
    %51 = vector.broadcast %cst_22 : f32 to vector<2x1x128xf32>
    %52 = arith.maximumf %50, %51 : vector<2x1x128xf32>
    %53 = vector.broadcast %43 : vector<2x1x128xf32> to vector<2x16x128xf32>
    %54 = arith.subf %39, %53 : vector<2x16x128xf32>
    %cst_23 = arith.constant 9.99999974E-6 : f32
    %55 = vector.broadcast %cst_23 : f32 to vector<2x1x128xf32>
    %56 = arith.addf %52, %55 : vector<2x1x128xf32>
    %57 = math.rsqrt %56 : vector<2x1x128xf32>
    %58 = vector.broadcast %57 : vector<2x1x128xf32> to vector<2x16x128xf32>
    %59 = arith.mulf %54, %58 : vector<2x16x128xf32>
    %cst_24 = arith.constant 0.000000e+00 : f32
    %60 = vector.broadcast %cst_24 : f32 to vector<2x16x128xf32>
    %61 = arith.cmpf oge, %59, %60 : vector<2x16x128xf32>
    %cst_25 = arith.constant 2.000000e-01 : f32
    %62 = vector.broadcast %cst_25 : f32 to vector<2x16x128xf32>
    %63 = arith.mulf %62, %59 : vector<2x16x128xf32>
    %64 = arith.select %61, %59, %63 : vector<2x16x128xi1>, vector<2x16x128xf32>
    %cst_26 = arith.constant dense<0.000000e+00> : vector<2x128xf32>
    %65 = vector.multi_reduction <add>, %64, %cst_26 [1] : vector<2x16x128xf32> to vector<2x128xf32>
    %66 = vector.shape_cast %65 : vector<2x128xf32> to vector<2x1x128xf32>
    %cst_27 = arith.constant 1.600000e+01 : f32
    %67 = vector.broadcast %cst_27 : f32 to vector<2x1x128xf32>
    %68 = arith.divf %66, %67 : vector<2x1x128xf32>
    %c0_28 = arith.constant 0 : index
    %c0_29 = arith.constant 0 : index
    %c0_30 = arith.constant 0 : index
    %69 = vector.load %arg6[%c0_28, %c0_29, %c0_30] : memref<2x1x128xf32, #tpu.memory_space<vmem>>, vector<2x1x128xf32>
    tpu.vector_store %arg6[%c0_28, %c0_29, %c0_30], %68 {strides = array<i32>} : memref<2x1x128xf32, #tpu.memory_space<vmem>>, vector<2x1x128xf32>,
    return
  }
  func.func @transform_0(%arg0: i32) -> (i32, i32) {
    %c0_i32 = arith.constant 0 : i32
    %c0_i32_0 = arith.constant 0 : i32
    %c0_i32_1 = arith.constant 0 : i32
    return %c0_i32, %c0_i32_0 : i32, i32
  }
  func.func @transform_1(%arg0: i32) -> (i32, i32) {
    %c0_i32 = arith.constant 0 : i32
    %c0_i32_0 = arith.constant 0 : i32
    %c0_i32_1 = arith.constant 0 : i32
    return %c0_i32, %c0_i32_0 : i32, i32
  }
  func.func @transform_2(%arg0: i32) -> (i32, i32) {
    %c0_i32 = arith.constant 0 : i32
    %c0_i32_0 = arith.constant 0 : i32
    %c0_i32_1 = arith.constant 0 : i32
    return %c0_i32, %c0_i32_0 : i32, i32
  }
  func.func @transform_3(%arg0: i32) -> (i32, i32) {
    %c0_i32 = arith.constant 0 : i32
    %c0_i32_0 = arith.constant 0 : i32
    %c0_i32_1 = arith.constant 0 : i32
    return %c0_i32, %c0_i32_0 : i32, i32
  }
  func.func @transform_4(%arg0: i32) -> (i32, i32) {
    %c0_i32 = arith.constant 0 : i32
    %c0_i32_0 = arith.constant 0 : i32
    %c0_i32_1 = arith.constant 0 : i32
    return %c0_i32, %c0_i32_0 : i32, i32
  }
  func.func @transform_5(%arg0: i32) -> (i32, i32, i32) {
    %c0_i32 = arith.constant 0 : i32
    %c0_i32_0 = arith.constant 0 : i32
    %c0_i32_1 = arith.constant 0 : i32
    %c0_i32_2 = arith.constant 0 : i32
    return %c0_i32, %c0_i32_0, %c0_i32_1 : i32, i32, i32
  }
}

</mosaic_0001>

<llo_original>
// kernel: style_encode_block_forward.2
$region0: #{style_encode_block_forward.2}
  #allocation0 [shape = 'u32[]', space=smem, size = 0x4, offset = 0x4, fixed_abs, tag = 'smem constant byte address 0x4 - core index']
  #allocation1 [shape = 'u32[72,128]{1,0:T(1,128)}', space=vmem, size = 0x9000, scoped, tag = 'internal scratch']
  %s0 = inlined_call_operand.vmem [shape: bf16[128,128], index: 0, kind: input, shape index: {}]
  %s1 = inlined_call_operand.vmem [shape: bf16[128,64], index: 1, kind: input, shape index: {}]
  %s2 = inlined_call_operand.vmem [shape: f32[1,64], index: 2, kind: input, shape index: {}]
  %s3 = inlined_call_operand.vmem [shape: bf16[2,64,64], index: 3, kind: output, shape index: {}]
  %s4 = sld [smem:[#allocation0]]
  $region22: #{style_encode_block_forward.2} parent=0
    _
  %s6 = ssub.s32 1, %s4
  %s7 = scalar_select 0, %s6, %s4
  // Predicated region
  $region2: #{style_encode_block_forward.2} parent=0 // pred_check
    _
  $region3: #{style_encode_block_forward.2} parent=0 // pred_check_branch
    %9 = sbr.rel (0) target = $region5
  $region4: #{style_encode_block_forward.2} parent=0 // pred_region
    _
  $region5: #{style_encode_block_forward.2} parent=0 // pred_fallthru
    _
  // Predicated region
  $region6: #{style_encode_block_forward.2} parent=0 // pred_check
    _
  $region7: #{style_encode_block_forward.2} parent=0 // pred_check_branch
    %11 = sbr.rel (0) target = $region9
  $region8: #{style_encode_block_forward.2} parent=0 // pred_region
    _
  $region9: #{style_encode_block_forward.2} parent=0 // pred_fallthru
    _
  // Predicated region
  $region10: #{style_encode_block_forward.2} parent=0 // pred_check
    _
  $region11: #{style_encode_block_forward.2} parent=0 // pred_check_branch
    %13 = sbr.rel (0) target = $region13
  $region12: #{style_encode_block_forward.2} parent=0 // pred_region
    _
  $region13: #{style_encode_block_forward.2} parent=0 // pred_fallthru
    _
  %v14 = vld [vmem:[%s0] sm:$0xf]
  %v15 = vld [vmem:[%s0 + $0x4] sm:$0xf]
  %v16 = vld [vmem:[%s0 + $0x8] sm:$0xf]
  %v17 = vld [vmem:[%s0 + $0xc] sm:$0xf]
  %v18 = vld [vmem:[%s0 + $0x10] sm:$0xf]
  %v19 = vld [vmem:[%s0 + $0x14] sm:$0xf]
  %v20 = vld [vmem:[%s0 + $0x18] sm:$0xf]
  %v21 = vld [vmem:[%s0 + $0x1c] sm:$0xf]
  %v22 = vld [vmem:[%s0 + $0x20] sm:$0xf]
  %v23 = vld [vmem:[%s0 + $0x24] sm:$0xf]
  %v24 = vld [vmem:[%s0 + $0x28] sm:$0xf]
  %v25 = vld [vmem:[%s0 + $0x2c] sm:$0xf]
  %v26 = vld [vmem:[%s0 + $0x30] sm:$0xf]
  %v27 = vld [vmem:[%s0 + $0x34] sm:$0xf]
  %v28 = vld [vmem:[%s0 + $0x38] sm:$0xf]
  %v29 = vld [vmem:[%s0 + $0x3c] sm:$0xf]
  %v30 = vld [vmem:[%s1] sm:$0xf]
  %v31 = vld [vmem:[%s1 + $0x4] sm:$0xf]
  %v32 = vld [vmem:[%s1 + $0x8] sm:$0xf]
  %v33 = vld [vmem:[%s1 + $0xc] sm:$0xf]
  %v34 = vld [vmem:[%s1 + $0x10] sm:$0xf]
  %v35 = vld [vmem:[%s1 + $0x14] sm:$0xf]
  %v36 = vld [vmem:[%s1 + $0x18] sm:$0xf]
  %v37 = vld [vmem:[%s1 + $0x1c] sm:$0xf]
  %v38 = vld [vmem:[%s1 + $0x20] sm:$0xf]
  %v39 = vld [vmem:[%s1 + $0x24] sm:$0xf]
  %v40 = vld [vmem:[%s1 + $0x28] sm:$0xf]
  %v41 = vld [vmem:[%s1 + $0x2c] sm:$0xf]
  %v42 = vld [vmem:[%s1 + $0x30] sm:$0xf]
  %v43 = vld [vmem:[%s1 + $0x34] sm:$0xf]
  %v44 = vld [vmem:[%s1 + $0x38] sm:$0xf]
  %v45 = vld [vmem:[%s1 + $0x3c] sm:$0xf]
  %v46 = vld [vmem:[%s2] sm:$0x1]
  %v48 = vperm.slane %v46, 0
  %v66 = vunpack.c.l.b16 %v14
  %v67 = vunpack.c.l.b16 %v15
  %v68 = vunpack.c.l.b16 %v16
  %v69 = vunpack.c.l.b16 %v17
  %v70 = vunpack.c.l.b16 %v18
  %v71 = vunpack.c.l.b16 %v19
  %v72 = vunpack.c.l.b16 %v20
  %v73 = vunpack.c.l.b16 %v21
  %v74 = vunpack.c.l.b16 %v22
  %v75 = vunpack.c.l.b16 %v23
  %v76 = vunpack.c.l.b16 %v24
  %v77 = vunpack.c.l.b16 %v25
  %v78 = vunpack.c.l.b16 %v26
  %v79 = vunpack.c.l.b16 %v27
  %v80 = vunpack.c.l.b16 %v28
  %v81 = vunpack.c.l.b16 %v29
  %v82 = vpack.c.b16 %v67, %v66
  %v83 = vpack.c.b16 %v69, %v68
  %v84 = vpack.c.b16 %v71, %v70
  %v85 = vpack.c.b16 %v73, %v72
  %v86 = vpack.c.b16 %v75, %v74
  %v87 = vpack.c.b16 %v77, %v76
  %v88 = vpack.c.b16 %v79, %v78
  %v89 = vpack.c.b16 %v81, %v80
  %v114 = vunpack.c.l.b16 %v30
  %v115 = vunpack.c.l.b16 %v31
  %v116 = vunpack.c.l.b16 %v32
  %v117 = vunpack.c.l.b16 %v33
  %v118 = vunpack.c.l.b16 %v34
  %v119 = vunpack.c.l.b16 %v35
  %v120 = vunpack.c.l.b16 %v36
  %v121 = vunpack.c.l.b16 %v37
  %v122 = vunpack.c.l.b16 %v38
  %v123 = vunpack.c.l.b16 %v39
  %v124 = vunpack.c.l.b16 %v40
  %v125 = vunpack.c.l.b16 %v41
  %v126 = vunpack.c.l.b16 %v42
  %v127 = vunpack.c.l.b16 %v43
  %v128 = vunpack.c.l.b16 %v44
  %v129 = vunpack.c.l.b16 %v45
  %v130 = vpack.c.b16 %v115, %v114
  %v131 = vpack.c.b16 %v117, %v116
  %v132 = vpack.c.b16 %v119, %v118
  %v133 = vpack.c.b16 %v121, %v120
  %v134 = vpack.c.b16 %v123, %v122
  %v135 = vpack.c.b16 %v125, %v124
  %v136 = vpack.c.b16 %v127, %v126
  %v137 = vpack.c.b16 %v129, %v128
  %146 = vmatpush.bf16.msra.mxu0 %v137
  %147 = vmatpush.bf16.msra.mxu0 %v136
  %148 = vmatpush.bf16.msra.mxu0 %v135
  %149 = vmatpush.bf16.msra.mxu0 %v134
  %150 = vmatpush.bf16.msra.mxu0 %v133
  %151 = vmatpush.bf16.msra.mxu0 %v132
  %152 = vmatpush.bf16.msra.mxu0 %v131
  %153 = vmatpush.bf16.msra.mxu0 %v130
  %154 = vmatmul.bf16.gmra.mxu0 %v82
  %v155 = vpop.f32.mrf.mxu0
  %v156 = vadd.f32 %v48, %v155
  %v157 = vpop.f32.mrf.mxu0
  %v158 = vadd.f32 %v48, %v157
  %159 = vmatmul.bf16.gmra.mxu0 %v83
  %v160 = vpop.f32.mrf.mxu0
  %v161 = vadd.f32 %v48, %v160
  %v162 = vpop.f32.mrf.mxu0
  %v163 = vadd.f32 %v48, %v162
  %164 = vmatmul.bf16.gmra.mxu0 %v84
  %v165 = vpop.f32.mrf.mxu0
  %v166 = vadd.f32 %v48, %v165
  %v167 = vpop.f32.mrf.mxu0
  %v168 = vadd.f32 %v48, %v167
  %169 = vmatmul.bf16.gmra.mxu0 %v85
  %v170 = vpop.f32.mrf.mxu0
  %v171 = vadd.f32 %v48, %v170
  %v172 = vpop.f32.mrf.mxu0
  %v173 = vadd.f32 %v48, %v172
  %174 = vmatmul.bf16.gmra.mxu0 %v86
  %v175 = vpop.f32.mrf.mxu0
  %v176 = vadd.f32 %v48, %v175
  %v177 = vpop.f32.mrf.mxu0
  %v178 = vadd.f32 %v48, %v177
  %179 = vmatmul.bf16.gmra.mxu0 %v87
  %v180 = vpop.f32.mrf.mxu0
  %v181 = vadd.f32 %v48, %v180
  %v182 = vpop.f32.mrf.mxu0
  %v183 = vadd.f32 %v48, %v182
  %184 = vmatmul.bf16.gmra.mxu0 %v88
  %v185 = vpop.f32.mrf.mxu0
  %v186 = vadd.f32 %v48, %v185
  %v187 = vpop.f32.mrf.mxu0
  %v188 = vadd.f32 %v48, %v187
  %189 = vmatmul.bf16.gmra.mxu0 %v89
  %v190 = vpop.f32.mrf.mxu0
  %v191 = vadd.f32 %v48, %v190
  %v192 = vpop.f32.mrf.mxu0
  %v193 = vadd.f32 %v48, %v192
  %194 = vdwg.mxu0
  %vm195 = vcmask 523264
  %v196 = vsel %vm195, %v156, 0.0
  %v197 = vsel %vm195, %v158, 0.0
  %v198 = vadd.f32 %v196, %v197
  %v199 = vsel %vm195, %v161, 0.0
  %v200 = vadd.f32 %v198, %v199
  %v201 = vsel %vm195, %v163, 0.0
  %v202 = vadd.f32 %v200, %v201
  %v203 = vsel %vm195, %v166, 0.0
  %v204 = vadd.f32 %v202, %v203
  %v205 = vsel %vm195, %v168, 0.0
  %v206 = vadd.f32 %v204, %v205
  %v207 = vsel %vm195, %v171, 0.0
  %v208 = vadd.f32 %v206, %v207
  %v209 = vsel %vm195, %v173, 0.0
  %v210 = vadd.f32 %v208, %v209
  %v211 = vrot.slane %v210, 4
  %v212 = vadd.f32 %v210, %v211
  %v213 = vrot.slane %v212, 2
  %v214 = vadd.f32 %v212, %v213
  %v215 = vrot.slane %v214, 1
  %v216 = vadd.f32 %v214, %v215
  %v217 = vsel %vm195, %v176, 0.0
  %v218 = vsel %vm195, %v178, 0.0
  %v219 = vadd.f32 %v217, %v218
  %v220 = vsel %vm195, %v181, 0.0
  %v221 = vadd.f32 %v219, %v220
  %v222 = vsel %vm195, %v183, 0.0
  %v223 = vadd.f32 %v221, %v222
  %v224 = vsel %vm195, %v186, 0.0
  %v225 = vadd.f32 %v223, %v224
  %v226 = vsel %vm195, %v188, 0.0
  %v227 = vadd.f32 %v225, %v226
  %v228 = vsel %vm195, %v191, 0.0
  %v229 = vadd.f32 %v227, %v228
  %v230 = vsel %vm195, %v193, 0.0
  %v231 = vadd.f32 %v229, %v230
  %v232 = vrot.slane %v231, 4
  %v233 = vadd.f32 %v231, %v232
  %v234 = vrot.slane %v233, 2
  %v235 = vadd.f32 %v233, %v234
  %v236 = vrot.slane %v235, 1
  %v237 = vadd.f32 %v235, %v236
  %v238 = vrcp.pop 64.0
  %v239 = vmul.f32 64.0, %v238
  %v240 = vsub.f32 1.0, %v239
  %v241 = vmul.f32 %v238, %v240
  %v242 = vadd.f32 %v238, %v241
  %vm243 = vweird.f32 %v238
  %v244 = vsel %vm243, %v238, %v242
  %v245 = vmul.f32 %v216, %v244
  %v246 = vmul.f32 %v237, %v244
  %v247 = vmul.f32 %v156, %v156
  %v248 = vmul.f32 %v158, %v158
  %v249 = vmul.f32 %v161, %v161
  %v250 = vmul.f32 %v163, %v163
  %v251 = vmul.f32 %v166, %v166
  %v252 = vmul.f32 %v168, %v168
  %v253 = vmul.f32 %v171, %v171
  %v254 = vmul.f32 %v173, %v173
  %v255 = vmul.f32 %v176, %v176
  %v256 = vmul.f32 %v178, %v178
  %v257 = vmul.f32 %v181, %v181
  %v258 = vmul.f32 %v183, %v183
  %v259 = vmul.f32 %v186, %v186
  %v260 = vmul.f32 %v188, %v188
  %v261 = vmul.f32 %v191, %v191
  %v262 = vmul.f32 %v193, %v193
  %v263 = vsel %vm195, %v247, 0.0
  %v264 = vsel %vm195, %v248, 0.0
  %v265 = vadd.f32 %v263, %v264
  %v266 = vsel %vm195, %v249, 0.0
  %v267 = vadd.f32 %v265, %v266
  %v268 = vsel %vm195, %v250, 0.0
  %v269 = vadd.f32 %v267, %v268
  %v270 = vsel %vm195, %v251, 0.0
  %v271 = vadd.f32 %v269, %v270
  %v272 = vsel %vm195, %v252, 0.0
  %v273 = vadd.f32 %v271, %v272
  %v274 = vsel %vm195, %v253, 0.0
  %v275 = vadd.f32 %v273, %v274
  %v276 = vsel %vm195, %v254, 0.0
  %v277 = vadd.f32 %v275, %v276
  %v278 = vrot.slane %v277, 4
  %v279 = vadd.f32 %v277, %v278
  %v280 = vrot.slane %v279, 2
  %v281 = vadd.f32 %v279, %v280
  %v282 = vrot.slane %v281, 1
  %v283 = vadd.f32 %v281, %v282
  %v284 = vsel %vm195, %v255, 0.0
  %v285 = vsel %vm195, %v256, 0.0
  %v286 = vadd.f32 %v284, %v285
  %v287 = vsel %vm195, %v257, 0.0
  %v288 = vadd.f32 %v286, %v287
  %v289 = vsel %vm195, %v258, 0.0
  %v290 = vadd.f32 %v288, %v289
  %v291 = vsel %vm195, %v259, 0.0
  %v292 = vadd.f32 %v290, %v291
  %v293 = vsel %vm195, %v260, 0.0
  %v294 = vadd.f32 %v292, %v293
  %v295 = vsel %vm195, %v261, 0.0
  %v296 = vadd.f32 %v294, %v295
  %v297 = vsel %vm195, %v262, 0.0
  %v298 = vadd.f32 %v296, %v297
  %v299 = vrot.slane %v298, 4
  %v300 = vadd.f32 %v298, %v299
  %v301 = vrot.slane %v300, 2
  %v302 = vadd.f32 %v300, %v301
  %v303 = vrot.slane %v302, 1
  %v304 = vadd.f32 %v302, %v303
  %v305 = vmul.f32 %v283, %v244
  %v306 = vmul.f32 %v304, %v244
  %v307 = vmul.f32 %v245, %v245
  %v308 = vmul.f32 %v246, %v246
  %v309 = vsub.f32 %v305, %v307
  %v310 = vsub.f32 %v306, %v308
  %v311 = vmax.f32 %v309, 0.0
  %v312 = vmax.f32 %v310, 0.0
  %v313 = vsub.f32 %v156, %v245
  %v314 = vsub.f32 %v158, %v245
  %v315 = vsub.f32 %v161, %v245
  %v316 = vsub.f32 %v163, %v245
  %v317 = vsub.f32 %v166, %v245
  %v318 = vsub.f32 %v168, %v245
  %v319 = vsub.f32 %v171, %v245
  %v320 = vsub.f32 %v173, %v245
  %v321 = vsub.f32 %v176, %v246
  %v322 = vsub.f32 %v178, %v246
  %v323 = vsub.f32 %v181, %v246
  %v324 = vsub.f32 %v183, %v246
  %v325 = vsub.f32 %v186, %v246
  %v326 = vsub.f32 %v188, %v246
  %v327 = vsub.f32 %v191, %v246
  %v328 = vsub.f32 %v193, %v246
  %v329 = vadd.f32 %v311, 1e-05
  %v330 = vadd.f32 %v312, 1e-05
  %v331 = vrsqrt.pop %v329
  %v332 = vmul.f32 %v331, %v329
  %v333 = vmul.f32 %v332, %v331
  %v334 = vmul.f32 0.5, %v333
  %v335 = vsub.f32 1.5, %v334
  %v336 = vmul.f32 %v331, %v335
  %vm337 = vweird.f32 %v329
  %vm338 = vweird.f32 %v331
  %vm339 = vmor %vm337, %vm338
  %v340 = vsel %vm339, %v331, %v336
  %v341 = vrsqrt.pop %v330
  %v342 = vmul.f32 %v341, %v330
  %v343 = vmul.f32 %v342, %v341
  %v344 = vmul.f32 0.5, %v343
  %v345 = vsub.f32 1.5, %v344
  %v346 = vmul.f32 %v341, %v345
  %vm347 = vweird.f32 %v330
  %vm348 = vweird.f32 %v341
  %vm349 = vmor %vm347, %vm348
  %v350 = vsel %vm349, %v341, %v346
  %v351 = vmul.f32 %v313, %v340
  %v352 = vmul.f32 %v314, %v340
  %v353 = vmul.f32 %v315, %v340
  %v354 = vmul.f32 %v316, %v340
  %v355 = vmul.f32 %v317, %v340
  %v356 = vmul.f32 %v318, %v340
  %v357 = vmul.f32 %v319, %v340
  %v358 = vmul.f32 %v320, %v340
  %v359 = vmul.f32 %v321, %v350
  %v360 = vmul.f32 %v322, %v350
  %v361 = vmul.f32 %v323, %v350
  %v362 = vmul.f32 %v324, %v350
  %v363 = vmul.f32 %v325, %v350
  %v364 = vmul.f32 %v326, %v350
  %v365 = vmul.f32 %v327, %v350
  %v366 = vmul.f32 %v328, %v350
  %vm367 = vcmp.ge.f32.partialorder %v351, 0.0
  %vm368 = vcmp.ge.f32.partialorder %v352, 0.0
  %vm369 = vcmp.ge.f32.partialorder %v353, 0.0
  %vm370 = vcmp.ge.f32.partialorder %v354, 0.0
  %vm371 = vcmp.ge.f32.partialorder %v355, 0.0
  %vm372 = vcmp.ge.f32.partialorder %v356, 0.0
  %vm373 = vcmp.ge.f32.partialorder %v357, 0.0
  %vm374 = vcmp.ge.f32.partialorder %v358, 0.0
  %vm375 = vcmp.ge.f32.partialorder %v359, 0.0
  %vm376 = vcmp.ge.f32.partialorder %v360, 0.0
  %vm377 = vcmp.ge.f32.partialorder %v361, 0.0
  %vm378 = vcmp.ge.f32.partialorder %v362, 0.0
  %vm379 = vcmp.ge.f32.partialorder %v363, 0.0
  %vm380 = vcmp.ge.f32.partialorder %v364, 0.0
  %vm381 = vcmp.ge.f32.partialorder %v365, 0.0
  %vm382 = vcmp.ge.f32.partialorder %v366, 0.0
  %v383 = vmul.f32 %v351, 0.2
  %v384 = vmul.f32 %v352, 0.2
  %v385 = vmul.f32 %v353, 0.2
  %v386 = vmul.f32 %v354, 0.2
  %v387 = vmul.f32 %v355, 0.2
  %v388 = vmul.f32 %v356, 0.2
  %v389 = vmul.f32 %v357, 0.2
  %v390 = vmul.f32 %v358, 0.2
  %v391 = vmul.f32 %v359, 0.2
  %v392 = vmul.f32 %v360, 0.2
  %v393 = vmul.f32 %v361, 0.2
  %v394 = vmul.f32 %v362, 0.2
  %v395 = vmul.f32 %v363, 0.2
  %v396 = vmul.f32 %v364, 0.2
  %v397 = vmul.f32 %v365, 0.2
  %v398 = vmul.f32 %v366, 0.2
  %v399 = vsel %vm367, %v351, %v383
  %v400 = vsel %vm368, %v352, %v384
  %v401 = vsel %vm369, %v353, %v385
  %v402 = vsel %vm370, %v354, %v386
  %v403 = vsel %vm371, %v355, %v387
  %v404 = vsel %vm372, %v356, %v388
  %v405 = vsel %vm373, %v357, %v389
  %v406 = vsel %vm374, %v358, %v390
  %v407 = vsel %vm375, %v359, %v391
  %v408 = vsel %vm376, %v360, %v392
  %v409 = vsel %vm377, %v361, %v393
  %v410 = vsel %vm378, %v362, %v394
  %v411 = vsel %vm379, %v363, %v395
  %v412 = vsel %vm380, %v364, %v396
  %v413 = vsel %vm381, %v365, %v397
  %v414 = vsel %vm382, %v366, %v398
  %v415 = vpack.c.bf16 %v399, %v399
  %v416 = vpack.c.bf16 %v400, %v400
  %v417 = vpack.c.bf16 %v401, %v401
  %v418 = vpack.c.bf16 %v402, %v402
  %v419 = vpack.c.bf16 %v403, %v403
  %v420 = vpack.c.bf16 %v404, %v404
  %v421 = vpack.c.bf16 %v405, %v405
  %v422 = vpack.c.bf16 %v406, %v406
  %v423 = vpack.c.bf16 %v407, %v407
  %v424 = vpack.c.bf16 %v408, %v408
  %v425 = vpack.c.bf16 %v409, %v409
  %v426 = vpack.c.bf16 %v410, %v410
  %v427 = vpack.c.bf16 %v411, %v411
  %v428 = vpack.c.bf16 %v412, %v412
  %v429 = vpack.c.bf16 %v413, %v413
  %v430 = vpack.c.bf16 %v414, %v414
  %vm431 = vcmask 519168
  %432 = vst.msk [vmem:[%s3] sm:$0xf] %vm431, %v415
  %433 = vst.msk [vmem:[%s3 + $0x4] sm:$0xf] %vm431, %v416
  %434 = vst.msk [vmem:[%s3 + $0x8] sm:$0xf] %vm431, %v417
  %435 = vst.msk [vmem:[%s3 + $0xc] sm:$0xf] %vm431, %v418
  %436 = vst.msk [vmem:[%s3 + $0x10] sm:$0xf] %vm431, %v419
  %437 = vst.msk [vmem:[%s3 + $0x14] sm:$0xf] %vm431, %v420
  %438 = vst.msk [vmem:[%s3 + $0x18] sm:$0xf] %vm431, %v421
  %439 = vst.msk [vmem:[%s3 + $0x1c] sm:$0xf] %vm431, %v422
  %440 = vst.msk [vmem:[%s3 + $0x20] sm:$0xf] %vm431, %v423
  %441 = vst.msk [vmem:[%s3 + $0x24] sm:$0xf] %vm431, %v424
  %442 = vst.msk [vmem:[%s3 + $0x28] sm:$0xf] %vm431, %v425
  %443 = vst.msk [vmem:[%s3 + $0x2c] sm:$0xf] %vm431, %v426
  %444 = vst.msk [vmem:[%s3 + $0x30] sm:$0xf] %vm431, %v427
  %445 = vst.msk [vmem:[%s3 + $0x34] sm:$0xf] %vm431, %v428
  %446 = vst.msk [vmem:[%s3 + $0x38] sm:$0xf] %vm431, %v429
  %447 = vst.msk [vmem:[%s3 + $0x3c] sm:$0xf] %vm431, %v430
  // Predicated region
  $region14: #{style_encode_block_forward.2} parent=0 // pred_check
    _
  $region15: #{style_encode_block_forward.2} parent=0 // pred_check_branch
    %449 = sbr.rel (0) target = $region17
  $region16: #{style_encode_block_forward.2} parent=0 // pred_region
    _
  $region17: #{style_encode_block_forward.2} parent=0 // pred_fallthru
    _
  // Predicated region
  $region18: #{style_encode_block_forward.2} parent=0 // pred_check
    _
  $region19: #{style_encode_block_forward.2} parent=0 // pred_check_branch
    %451 = sbr.rel (0) target = $region21
  $region20: #{style_encode_block_forward.2} parent=0 // pred_region
    _
  $region21: #{style_encode_block_forward.2} parent=0 // pred_fallthru
    _

// kernel: style_encode_block_forward.3
$region0: #{style_encode_block_forward.3}
  #allocation0 [shape = 'u32[]', space=smem, size = 0x4, offset = 0x4, fixed_abs, tag = 'smem constant byte address 0x4 - core index']
  #allocation1 [shape = 'u32[72,128]{1,0:T(1,128)}', space=vmem, size = 0x9000, scoped, tag = 'internal scratch']
  %s0 = inlined_call_operand.vmem [shape: bf16[32,640], index: 0, kind: input, shape index: {}]
  %s1 = inlined_call_operand.vmem [shape: bf16[640,128], index: 1, kind: input, shape index: {}]
  %s2 = inlined_call_operand.vmem [shape: f32[1,128], index: 2, kind: input, shape index: {}]
  %s3 = inlined_call_operand.vmem [shape: bf16[128,128], index: 3, kind: input, shape index: {}]
  %s4 = inlined_call_operand.vmem [shape: f32[1,128], index: 4, kind: input, shape index: {}]
  %s5 = inlined_call_operand.hbm [shape: f32[2,1,128], index: 5, kind: output, shape index: {}]
  %s6 = sld [smem:[#allocation0]]
  $region30: #{style_encode_block_forward.3} parent=0
    _
  %s8 = ssub.s32 1, %s6
  %s9 = scalar_select 0, %s8, %s6
  $region1: #{style_encode_block_forward.3} parent=0
    #allocation2 [shape = 'u8[1024]{0}', space=vmem, size = 0x400, scoped, tag = 'output window, operand 0, single buffered']
    #allocation3 [shape = 's32[1]{0}', space=sflag, size = 0x4, scoped, tag = 'scoped memory for style_encode_block_forward.3']
    %10 = vsyncpa [#allocation3], 0
    // Predicated region
    $region2: #{style_encode_block_forward.3} parent=1 // pred_check
      _
    $region3: #{style_encode_block_forward.3} parent=1 // pred_check_branch
      %12 = sbr.rel (0) target = $region5
    $region4: #{style_encode_block_forward.3} parent=1 // pred_region
      _
    $region5: #{style_encode_block_forward.3} parent=1 // pred_fallthru
      _
    // Predicated region
    $region6: #{style_encode_block_forward.3} parent=1 // pred_check
      _
    $region7: #{style_encode_block_forward.3} parent=1 // pred_check_branch
      %14 = sbr.rel (0) target = $region9
    $region8: #{style_encode_block_forward.3} parent=1 // pred_region
      _
    $region9: #{style_encode_block_forward.3} parent=1 // pred_fallthru
      _
    // Predicated region
    $region10: #{style_encode_block_forward.3} parent=1 // pred_check
      _
    $region11: #{style_encode_block_forward.3} parent=1 // pred_check_branch
      %16 = sbr.rel (0) target = $region13
    $region12: #{style_encode_block_forward.3} parent=1 // pred_region
      _
    $region13: #{style_encode_block_forward.3} parent=1 // pred_fallthru
      _
    // Predicated region
    $region14: #{style_encode_block_forward.3} parent=1 // pred_check
      _
    $region15: #{style_encode_block_forward.3} parent=1 // pred_check_branch
      %18 = sbr.rel (0) target = $region17
    $region16: #{style_encode_block_forward.3} parent=1 // pred_region
      _
    $region17: #{style_encode_block_forward.3} parent=1 // pred_fallthru
      _
    // Predicated region
    $region18: #{style_encode_block_forward.3} parent=1 // pred_check
      _
    $region19: #{style_encode_block_forward.3} parent=1 // pred_check_branch
      %20 = sbr.rel (0) target = $region21
    $region20: #{style_encode_block_forward.3} parent=1 // pred_region
      _
    $region21: #{style_encode_block_forward.3} parent=1 // pred_fallthru
      _
    %v21 = vld [vmem:[%s0] sm:$0xff]
    %v22 = vld [vmem:[%s0 + $0x8] sm:$0xff]
    %v23 = vld [vmem:[%s0 + $0x10] sm:$0xf]
    %v24 = vld [vmem:[%s0 + $0x14] sm:$0xff]
    %v25 = vld [vmem:[%s0 + $0x1c] sm:$0xff]
    %v26 = vld [vmem:[%s0 + $0x24] sm:$0xf]
    %v27 = vld [vmem:[%s0 + $0x28] sm:$0xff]
    %v28 = vld [vmem:[%s0 + $0x30] sm:$0xff]
    %v29 = vld [vmem:[%s0 + $0x38] sm:$0xf]
    %v30 = vld [vmem:[%s0 + $0x3c] sm:$0xff]
    %v31 = vld [vmem:[%s0 + $0x44] sm:$0xff]
    %v32 = vld [vmem:[%s0 + $0x4c] sm:$0xf]
    %v33 = vld [vmem:[%s1] sm:$0xf]
    %v34 = vld [vmem:[%s1 + $0x4] sm:$0xf]
    %v35 = vld [vmem:[%s1 + $0x8] sm:$0xf]
    %v36 = vld [vmem:[%s1 + $0xc] sm:$0xf]
    %v37 = vld [vmem:[%s1 + $0x10] sm:$0xf]
    %v38 = vld [vmem:[%s1 + $0x14] sm:$0xf]
    %v39 = vld [vmem:[%s1 + $0x18] sm:$0xf]
    %v40 = vld [vmem:[%s1 + $0x1c] sm:$0xf]
    %v41 = vld [vmem:[%s1 + $0x20] sm:$0xf]
    %v42 = vld [vmem:[%s1 + $0x24] sm:$0xf]
    %v43 = vld [vmem:[%s1 + $0x28] sm:$0xf]
    %v44 = vld [vmem:[%s1 + $0x2c] sm:$0xf]
    %v45 = vld [vmem:[%s1 + $0x30] sm:$0xf]
    %v46 = vld [vmem:[%s1 + $0x34] sm:$0xf]
    %v47 = vld [vmem:[%s1 + $0x38] sm:$0xf]
    %v48 = vld [vmem:[%s1 + $0x3c] sm:$0xf]
    %v49 = vld [vmem:[%s1 + $0x40] sm:$0xf]
    %v50 = vld [vmem:[%s1 + $0x44] sm:$0xf]
    %v51 = vld [vmem:[%s1 + $0x48] sm:$0xf]
    %v52 = vld [vmem:[%s1 + $0x4c] sm:$0xf]
    %v53 = vld [vmem:[%s1 + $0x50] sm:$0xf]
    %v54 = vld [vmem:[%s1 + $0x54] sm:$0xf]
    %v55 = vld [vmem:[%s1 + $0x58] sm:$0xf]
    %v56 = vld [vmem:[%s1 + $0x5c] sm:$0xf]
    %v57 = vld [vmem:[%s1 + $0x60] sm:$0xf]
    %v58 = vld [vmem:[%s1 + $0x64] sm:$0xf]
    %v59 = vld [vmem:[%s1 + $0x68] sm:$0xf]
    %v60 = vld [vmem:[%s1 + $0x6c] sm:$0xf]
    %v61 = vld [vmem:[%s1 + $0x70] sm:$0xf]
    %v62 = vld [vmem:[%s1 + $0x74] sm:$0xf]
    %v63 = vld [vmem:[%s1 + $0x78] sm:$0xf]
    %v64 = vld [vmem:[%s1 + $0x7c] sm:$0xf]
    %v65 = vld [vmem:[%s1 + $0x80] sm:$0xf]
    %v66 = vld [vmem:[%s1 + $0x84] sm:$0xf]
    %v67 = vld [vmem:[%s1 + $0x88] sm:$0xf]
    %v68 = vld [vmem:[%s1 + $0x8c] sm:$0xf]
    %v69 = vld [vmem:[%s1 + $0x90] sm:$0xf]
    %v70 = vld [vmem:[%s1 + $0x94] sm:$0xf]
    %v71 = vld [vmem:[%s1 + $0x98] sm:$0xf]
    %v72 = vld [vmem:[%s1 + $0x9c] sm:$0xf]
    %v73 = vld [vmem:[%s1 + $0xa0] sm:$0xf]
    %v74 = vld [vmem:[%s1 + $0xa4] sm:$0xf]
    %v75 = vld [vmem:[%s1 + $0xa8] sm:$0xf]
    %v76 = vld [vmem:[%s1 + $0xac] sm:$0xf]
    %v77 = vld [vmem:[%s1 + $0xb0] sm:$0xf]
    %v78 = vld [vmem:[%s1 + $0xb4] sm:$0xf]
    %v79 = vld [vmem:[%s1 + $0xb8] sm:$0xf]
    %v80 = vld [vmem:[%s1 + $0xbc] sm:$0xf]
    %v81 = vld [vmem:[%s1 + $0xc0] sm:$0xf]
    %v82 = vld [vmem:[%s1 + $0xc4] sm:$0xf]
    %v83 = vld [vmem:[%s1 + $0xc8] sm:$0xf]
    %v84 = vld [vmem:[%s1 + $0xcc] sm:$0xf]
    %v85 = vld [vmem:[%s1 + $0xd0] sm:$0xf]
    %v86 = vld [vmem:[%s1 + $0xd4] sm:$0xf]
    %v87 = vld [vmem:[%s1 + $0xd8] sm:$0xf]
    %v88 = vld [vmem:[%s1 + $0xdc] sm:$0xf]
    %v89 = vld [vmem:[%s1 + $0xe0] sm:$0xf]
    %v90 = vld [vmem:[%s1 + $0xe4] sm:$0xf]
    %v91 = vld [vmem:[%s1 + $0xe8] sm:$0xf]
    %v92 = vld [vmem:[%s1 + $0xec] sm:$0xf]
    %v93 = vld [vmem:[%s1 + $0xf0] sm:$0xf]
    %v94 = vld [vmem:[%s1 + $0xf4] sm:$0xf]
    %v95 = vld [vmem:[%s1 + $0xf8] sm:$0xf]
    %v96 = vld [vmem:[%s1 + $0xfc] sm:$0xf]
    %v97 = vld [vmem:[%s1 + $0x100] sm:$0xf]
    %v98 = vld [vmem:[%s1 + $0x104] sm:$0xf]
    %v99 = vld [vmem:[%s1 + $0x108] sm:$0xf]
    %v100 = vld [vmem:[%s1 + $0x10c] sm:$0xf]
    %v101 = vld [vmem:[%s1 + $0x110] sm:$0xf]
    %v102 = vld [vmem:[%s1 + $0x114] sm:$0xf]
    %v103 = vld [vmem:[%s1 + $0x118] sm:$0xf]
    %v104 = vld [vmem:[%s1 + $0x11c] sm:$0xf]
    %v105 = vld [vmem:[%s1 + $0x120] sm:$0xf]
    %v106 = vld [vmem:[%s1 + $0x124] sm:$0xf]
    %v107 = vld [vmem:[%s1 + $0x128] sm:$0xf]
    %v108 = vld [vmem:[%s1 + $0x12c] sm:$0xf]
    %v109 = vld [vmem:[%s1 + $0x130] sm:$0xf]
    %v110 = vld [vmem:[%s1 + $0x134] sm:$0xf]
    %v111 = vld [vmem:[%s1 + $0x138] sm:$0xf]
    %v112 = vld [vmem:[%s1 + $0x13c] sm:$0xf]
    %v113 = vld [vmem:[%s2] sm:$0x1]
    %v115 = vperm.slane %v113, 0
    %v129 = vunpack.c.l.b16 %v21
    %v130 = vunpack.c.h.b16 %v21
    %v131 = vunpack.c.l.b16 %v22
    %v132 = vunpack.c.h.b16 %v22
    %v133 = vunpack.c.l.b16 %v23
    %v134 = vunpack.c.l.b16 %v24
    %v135 = vunpack.c.h.b16 %v24
    %v136 = vunpack.c.l.b16 %v25
    %v137 = vunpack.c.h.b16 %v25
    %v138 = vunpack.c.l.b16 %v26
    %v139 = vunpack.c.l.b16 %v27
    %v140 = vunpack.c.h.b16 %v27
    %v141 = vunpack.c.l.b16 %v28
    %v142 = vunpack.c.h.b16 %v28
    %v143 = vunpack.c.l.b16 %v29
    %v144 = vunpack.c.l.b16 %v30
    %v145 = vunpack.c.h.b16 %v30
    %v146 = vunpack.c.l.b16 %v31
    %v147 = vunpack.c.h.b16 %v31
    %v148 = vunpack.c.l.b16 %v32
    %v149 = vpack.c.b16 %v134, %v129
    %v150 = vpack.c.b16 %v135, %v130
    %v151 = vpack.c.b16 %v136, %v131
    %v152 = vpack.c.b16 %v137, %v132
    %v153 = vpack.c.b16 %v138, %v133
    %v154 = vpack.c.b16 %v144, %v139
    %v155 = vpack.c.b16 %v145, %v140
    %v156 = vpack.c.b16 %v146, %v141
    %v157 = vpack.c.b16 %v147, %v142
    %v158 = vpack.c.b16 %v148, %v143
    %v249 = vunpack.c.l.b16 %v33
    %v250 = vunpack.c.l.b16 %v34
    %v251 = vunpack.c.l.b16 %v35
    %v252 = vunpack.c.l.b16 %v36
    %v253 = vunpack.c.l.b16 %v37
    %v254 = vunpack.c.l.b16 %v38
    %v255 = vunpack.c.l.b16 %v39
    %v256 = vunpack.c.l.b16 %v40
    %v257 = vunpack.c.l.b16 %v41
    %v258 = vunpack.c.l.b16 %v42
    %v259 = vunpack.c.l.b16 %v43
    %v260 = vunpack.c.l.b16 %v44
    %v261 = vunpack.c.l.b16 %v45
    %v262 = vunpack.c.l.b16 %v46
    %v263 = vunpack.c.l.b16 %v47
    %v264 = vunpack.c.l.b16 %v48
    %v265 = vunpack.c.l.b16 %v49
    %v266 = vunpack.c.l.b16 %v50
    %v267 = vunpack.c.l.b16 %v51
    %v268 = vunpack.c.l.b16 %v52
    %v269 = vunpack.c.l.b16 %v53
    %v270 = vunpack.c.l.b16 %v54
    %v271 = vunpack.c.l.b16 %v55
    %v272 = vunpack.c.l.b16 %v56
    %v273 = vunpack.c.l.b16 %v57
    %v274 = vunpack.c.l.b16 %v58
    %v275 = vunpack.c.l.b16 %v59
    %v276 = vunpack.c.l.b16 %v60
    %v277 = vunpack.c.l.b16 %v61
    %v278 = vunpack.c.l.b16 %v62
    %v279 = vunpack.c.l.b16 %v63
    %v280 = vunpack.c.l.b16 %v64
    %v281 = vunpack.c.l.b16 %v65
    %v282 = vunpack.c.l.b16 %v66
    %v283 = vunpack.c.l.b16 %v67
    %v284 = vunpack.c.l.b16 %v68
    %v285 = vunpack.c.l.b16 %v69
    %v286 = vunpack.c.l.b16 %v70
    %v287 = vunpack.c.l.b16 %v71
    %v288 = vunpack.c.l.b16 %v72
    %v289 = vunpack.c.l.b16 %v73
    %v290 = vunpack.c.l.b16 %v74
    %v291 = vunpack.c.l.b16 %v75
    %v292 = vunpack.c.l.b16 %v76
    %v293 = vunpack.c.l.b16 %v77
    %v294 = vunpack.c.l.b16 %v78
    %v295 = vunpack.c.l.b16 %v79
    %v296 = vunpack.c.l.b16 %v80
    %v297 = vunpack.c.l.b16 %v81
    %v298 = vunpack.c.l.b16 %v82
    %v299 = vunpack.c.l.b16 %v83
    %v300 = vunpack.c.l.b16 %v84
    %v301 = vunpack.c.l.b16 %v85
    %v302 = vunpack.c.l.b16 %v86
    %v303 = vunpack.c.l.b16 %v87
    %v304 = vunpack.c.l.b16 %v88
    %v305 = vunpack.c.l.b16 %v89
    %v306 = vunpack.c.l.b16 %v90
    %v307 = vunpack.c.l.b16 %v91
    %v308 = vunpack.c.l.b16 %v92
    %v309 = vunpack.c.l.b16 %v93
    %v310 = vunpack.c.l.b16 %v94
    %v311 = vunpack.c.l.b16 %v95
    %v312 = vunpack.c.l.b16 %v96
    %v313 = vunpack.c.l.b16 %v97
    %v314 = vunpack.c.l.b16 %v98
    %v315 = vunpack.c.l.b16 %v99
    %v316 = vunpack.c.l.b16 %v100
    %v317 = vunpack.c.l.b16 %v101
    %v318 = vunpack.c.l.b16 %v102
    %v319 = vunpack.c.l.b16 %v103
    %v320 = vunpack.c.l.b16 %v104
    %v321 = vunpack.c.l.b16 %v105
    %v322 = vunpack.c.l.b16 %v106
    %v323 = vunpack.c.l.b16 %v107
    %v324 = vunpack.c.l.b16 %v108
    %v325 = vunpack.c.l.b16 %v109
    %v326 = vunpack.c.l.b16 %v110
    %v327 = vunpack.c.l.b16 %v111
    %v328 = vunpack.c.l.b16 %v112
    %v329 = vpack.c.b16 %v250, %v249
    %v330 = vpack.c.b16 %v252, %v251
    %v331 = vpack.c.b16 %v254, %v253
    %v332 = vpack.c.b16 %v256, %v255
    %v333 = vpack.c.b16 %v258, %v257
    %v334 = vpack.c.b16 %v260, %v259
    %v335 = vpack.c.b16 %v262, %v261
    %v336 = vpack.c.b16 %v264, %v263
    %v337 = vpack.c.b16 %v266, %v265
    %v338 = vpack.c.b16 %v268, %v267
    %v339 = vpack.c.b16 %v270, %v269
    %v340 = vpack.c.b16 %v272, %v271
    %v341 = vpack.c.b16 %v274, %v273
    %v342 = vpack.c.b16 %v276, %v275
    %v343 = vpack.c.b16 %v278, %v277
    %v344 = vpack.c.b16 %v280, %v279
    %v345 = vpack.c.b16 %v282, %v281
    %v346 = vpack.c.b16 %v284, %v283
    %v347 = vpack.c.b16 %v286, %v285
    %v348 = vpack.c.b16 %v288, %v287
    %v349 = vpack.c.b16 %v290, %v289
    %v350 = vpack.c.b16 %v292, %v291
    %v351 = vpack.c.b16 %v294, %v293
    %v352 = vpack.c.b16 %v296, %v295
    %v353 = vpack.c.b16 %v298, %v297
    %v354 = vpack.c.b16 %v300, %v299
    %v355 = vpack.c.b16 %v302, %v301
    %v356 = vpack.c.b16 %v304, %v303
    %v357 = vpack.c.b16 %v306, %v305
    %v358 = vpack.c.b16 %v308, %v307
    %v359 = vpack.c.b16 %v310, %v309
    %v360 = vpack.c.b16 %v312, %v311
    %v361 = vpack.c.b16 %v314, %v313
    %v362 = vpack.c.b16 %v316, %v315
    %v363 = vpack.c.b16 %v318, %v317
    %v364 = vpack.c.b16 %v320, %v319
    %v365 = vpack.c.b16 %v322, %v321
    %v366 = vpack.c.b16 %v324, %v323
    %v367 = vpack.c.b16 %v326, %v325
    %v368 = vpack.c.b16 %v328, %v327
    %409 = vmatpush.bf16.msra.mxu0 %v336
    %410 = vmatpush.bf16.msra.mxu0 %v335
    %411 = vmatpush.bf16.msra.mxu0 %v334
    %412 = vmatpush.bf16.msra.mxu0 %v333
    %413 = vmatpush.bf16.msra.mxu0 %v332
    %414 = vmatpush.bf16.msra.mxu0 %v331
    %415 = vmatpush.bf16.msra.mxu0 %v330
    %416 = vmatpush.bf16.msra.mxu0 %v329
    %417 = vmatmul.bf16.gmra.mxu0 %v149
    %v418 = vpop.f32.mrf.mxu0
    %v419 = vadd.f32 %v115, %v418
    %v420 = vpop.f32.mrf.mxu0
    %v421 = vadd.f32 %v115, %v420
    %422 = vmatmul.bf16.gmra.mxu0 %v154
    %v423 = vpop.f32.mrf.mxu0
    %v424 = vadd.f32 %v115, %v423
    %v425 = vpop.f32.mrf.mxu0
    %v426 = vadd.f32 %v115, %v425
    %427 = vdwg.mxu0
    %428 = vmatpush.bf16.msra.mxu0 %v344
    %429 = vmatpush.bf16.msra.mxu0 %v343
    %430 = vmatpush.bf16.msra.mxu0 %v342
    %431 = vmatpush.bf16.msra.mxu0 %v341
    %432 = vmatpush.bf16.msra.mxu0 %v340
    %433 = vmatpush.bf16.msra.mxu0 %v339
    %434 = vmatpush.bf16.msra.mxu0 %v338
    %435 = vmatpush.bf16.msra.mxu0 %v337
    %436 = vmatmul.bf16.gmra.mxu0 %v150
    %v437 = vpop.f32.mrf.mxu0
    %v438 = vadd.f32 %v419, %v437
    %v439 = vpop.f32.mrf.mxu0
    %v440 = vadd.f32 %v421, %v439
    %441 = vmatmul.bf16.gmra.mxu0 %v155
    %v442 = vpop.f32.mrf.mxu0
    %v443 = vadd.f32 %v424, %v442
    %v444 = vpop.f32.mrf.mxu0
    %v445 = vadd.f32 %v426, %v444
    %446 = vdwg.mxu0
    %447 = vmatpush.bf16.msra.mxu0 %v352
    %448 = vmatpush.bf16.msra.mxu0 %v351
    %449 = vmatpush.bf16.msra.mxu0 %v350
    %450 = vmatpush.bf16.msra.mxu0 %v349
    %451 = vmatpush.bf16.msra.mxu0 %v348
    %452 = vmatpush.bf16.msra.mxu0 %v347
    %453 = vmatpush.bf16.msra.mxu0 %v346
    %454 = vmatpush.bf16.msra.mxu0 %v345
    %455 = vmatmul.bf16.gmra.mxu0 %v151
    %v456 = vpop.f32.mrf.mxu0
    %v457 = vadd.f32 %v438, %v456
    %v458 = vpop.f32.mrf.mxu0
    %v459 = vadd.f32 %v440, %v458
    %460 = vmatmul.bf16.gmra.mxu0 %v156
    %v461 = vpop.f32.mrf.mxu0
    %v462 = vadd.f32 %v443, %v461
    %v463 = vpop.f32.mrf.mxu0
    %v464 = vadd.f32 %v445, %v463
    %465 = vdwg.mxu0
    %466 = vmatpush.bf16.msra.mxu0 %v360
    %467 = vmatpush.bf16.msra.mxu0 %v359
    %468 = vmatpush.bf16.msra.mxu0 %v358
    %469 = vmatpush.bf16.msra.mxu0 %v357
    %470 = vmatpush.bf16.msra.mxu0 %v356
    %471 = vmatpush.bf16.msra.mxu0 %v355
    %472 = vmatpush.bf16.msra.mxu0 %v354
    %473 = vmatpush.bf16.msra.mxu0 %v353
    %474 = vmatmul.bf16.gmra.mxu0 %v152
    %v475 = vpop.f32.mrf.mxu0
    %v476 = vadd.f32 %v457, %v475
    %v477 = vpop.f32.mrf.mxu0
    %v478 = vadd.f32 %v459, %v477
    %479 = vmatmul.bf16.gmra.mxu0 %v157
    %v480 = vpop.f32.mrf.mxu0
    %v481 = vadd.f32 %v462, %v480
    %v482 = vpop.f32.mrf.mxu0
    %v483 = vadd.f32 %v464, %v482
    %484 = vdwg.mxu0
    %485 = vmatpush.bf16.msra.mxu0 %v368
    %486 = vmatpush.bf16.msra.mxu0 %v367
    %487 = vmatpush.bf16.msra.mxu0 %v366
    %488 = vmatpush.bf16.msra.mxu0 %v365
    %489 = vmatpush.bf16.msra.mxu0 %v364
    %490 = vmatpush.bf16.msra.mxu0 %v363
    %491 = vmatpush.bf16.msra.mxu0 %v362
    %492 = vmatpush.bf16.msra.mxu0 %v361
    %493 = vmatmul.bf16.gmra.mxu0 %v153
    %v494 = vpop.f32.mrf.mxu0
    %v495 = vadd.f32 %v476, %v494
    %v496 = vpop.f32.mrf.mxu0
    %v497 = vadd.f32 %v478, %v496
    %498 = vmatmul.bf16.gmra.mxu0 %v158
    %v499 = vpop.f32.mrf.mxu0
    %v500 = vadd.f32 %v481, %v499
    %v501 = vpop.f32.mrf.mxu0
    %v502 = vadd.f32 %v483, %v501
    %503 = vdwg.mxu0
    %v504 = vadd.f32 %v495, %v497
    %v505 = vrot.slane %v504, 4
    %v506 = vadd.f32 %v504, %v505
    %v507 = vrot.slane %v506, 2
    %v508 = vadd.f32 %v506, %v507
    %v509 = vrot.slane %v508, 1
    %v510 = vadd.f32 %v508, %v509
    %v511 = vadd.f32 %v500, %v502
    %v512 = vrot.slane %v511, 4
    %v513 = vadd.f32 %v511, %v512
    %v514 = vrot.slane %v513, 2
    %v515 = vadd.f32 %v513, %v514
    %v516 = vrot.slane %v515, 1
    %v517 = vadd.f32 %v515, %v516
    %v518 = vrcp.pop 16.0
    %v519 = vmul.f32 16.0, %v518
    %v520 = vsub.f32 1.0, %v519
    %v521 = vmul.f32 %v518, %v520
    %v522 = vadd.f32 %v518, %v521
    %vm523 = vweird.f32 %v518
    %v524 = vsel %vm523, %v518, %v522
    %v525 = vmul.f32 %v510, %v524
    %v526 = vmul.f32 %v517, %v524
    %v527 = vmul.f32 %v495, %v495
    %v528 = vmul.f32 %v497, %v497
    %v529 = vmul.f32 %v500, %v500
    %v530 = vmul.f32 %v502, %v502
    %v531 = vadd.f32 %v527, %v528
    %v532 = vrot.slane %v531, 4
    %v533 = vadd.f32 %v531, %v532
    %v534 = vrot.slane %v533, 2
    %v535 = vadd.f32 %v533, %v534
    %v536 = vrot.slane %v535, 1
    %v537 = vadd.f32 %v535, %v536
    %v538 = vadd.f32 %v529, %v530
    %v539 = vrot.slane %v538, 4
    %v540 = vadd.f32 %v538, %v539
    %v541 = vrot.slane %v540, 2
    %v542 = vadd.f32 %v540, %v541
    %v543 = vrot.slane %v542, 1
    %v544 = vadd.f32 %v542, %v543
    %v545 = vmul.f32 %v537, %v524
    %v546 = vmul.f32 %v544, %v524
    %v547 = vmul.f32 %v525, %v525
    %v548 = vmul.f32 %v526, %v526
    %v549 = vsub.f32 %v545, %v547
    %v550 = vsub.f32 %v546, %v548
    %v551 = vmax.f32 %v549, 0.0
    %v552 = vmax.f32 %v550, 0.0
    %v553 = vsub.f32 %v495, %v525
    %v554 = vsub.f32 %v497, %v525
    %v555 = vsub.f32 %v500, %v526
    %v556 = vsub.f32 %v502, %v526
    %v557 = vadd.f32 %v551, 1e-05
    %v558 = vadd.f32 %v552, 1e-05
    %v559 = vrsqrt.pop %v557
    %v560 = vmul.f32 %v559, %v557
    %v561 = vmul.f32 %v560, %v559
    %v562 = vmul.f32 0.5, %v561
    %v563 = vsub.f32 1.5, %v562
    %v564 = vmul.f32 %v559, %v563
    %vm565 = vweird.f32 %v557
    %vm566 = vweird.f32 %v559
    %vm567 = vmor %vm565, %vm566
    %v568 = vsel %vm567, %v559, %v564
    %v569 = vrsqrt.pop %v558
    %v570 = vmul.f32 %v569, %v558
    %v571 = vmul.f32 %v570, %v569
    %v572 = vmul.f32 0.5, %v571
    %v573 = vsub.f32 1.5, %v572
    %v574 = vmul.f32 %v569, %v573
    %vm575 = vweird.f32 %v558
    %vm576 = vweird.f32 %v569
    %vm577 = vmor %vm575, %vm576
    %v578 = vsel %vm577, %v569, %v574
    %v579 = vmul.f32 %v553, %v568
    %v580 = vmul.f32 %v554, %v568
    %v581 = vmul.f32 %v555, %v578
    %v582 = vmul.f32 %v556, %v578
    %vm583 = vcmp.ge.f32.partialorder %v579, 0.0
    %vm584 = vcmp.ge.f32.partialorder %v580, 0.0
    %vm585 = vcmp.ge.f32.partialorder %v581, 0.0
    %vm586 = vcmp.ge.f32.partialorder %v582, 0.0
    %v587 = vmul.f32 %v579, 0.2
    %v588 = vmul.f32 %v580, 0.2
    %v589 = vmul.f32 %v581, 0.2
    %v590 = vmul.f32 %v582, 0.2
    %v591 = vsel %vm583, %v579, %v587
    %v592 = vsel %vm584, %v580, %v588
    %v593 = vsel %vm585, %v581, %v589
    %v594 = vsel %vm586, %v582, %v590
    %v595 = vpack.c.bf16 %v592, %v591
    %v596 = vpack.c.bf16 %v594, %v593
    %v597 = vld [vmem:[%s3] sm:$0xf]
    %v598 = vld [vmem:[%s3 + $0x4] sm:$0xf]
    %v599 = vld [vmem:[%s3 + $0x8] sm:$0xf]
    %v600 = vld [vmem:[%s3 + $0xc] sm:$0xf]
    %v601 = vld [vmem:[%s3 + $0x10] sm:$0xf]
    %v602 = vld [vmem:[%s3 + $0x14] sm:$0xf]
    %v603 = vld [vmem:[%s3 + $0x18] sm:$0xf]
    %v604 = vld [vmem:[%s3 + $0x1c] sm:$0xf]
    %v605 = vld [vmem:[%s3 + $0x20] sm:$0xf]
    %v606 = vld [vmem:[%s3 + $0x24] sm:$0xf]
    %v607 = vld [vmem:[%s3 + $0x28] sm:$0xf]
    %v608 = vld [vmem:[%s3 + $0x2c] sm:$0xf]
    %v609 = vld [vmem:[%s3 + $0x30] sm:$0xf]
    %v610 = vld [vmem:[%s3 + $0x34] sm:$0xf]
    %v611 = vld [vmem:[%s3 + $0x38] sm:$0xf]
    %v612 = vld [vmem:[%s3 + $0x3c] sm:$0xf]
    %v613 = vld [vmem:[%s4] sm:$0x1]
    %v615 = vperm.slane %v613, 0
    %v633 = vunpack.c.l.b16 %v597
    %v634 = vunpack.c.l.b16 %v598
    %v635 = vunpack.c.l.b16 %v599
    %v636 = vunpack.c.l.b16 %v600
    %v637 = vunpack.c.l.b16 %v601
    %v638 = vunpack.c.l.b16 %v602
    %v639 = vunpack.c.l.b16 %v603
    %v640 = vunpack.c.l.b16 %v604
    %v641 = vunpack.c.l.b16 %v605
    %v642 = vunpack.c.l.b16 %v606
    %v643 = vunpack.c.l.b16 %v607
    %v644 = vunpack.c.l.b16 %v608
    %v645 = vunpack.c.l.b16 %v609
    %v646 = vunpack.c.l.b16 %v610
    %v647 = vunpack.c.l.b16 %v611
    %v648 = vunpack.c.l.b16 %v612
    %v649 = vpack.c.b16 %v634, %v633
    %v650 = vpack.c.b16 %v636, %v635
    %v651 = vpack.c.b16 %v638, %v637
    %v652 = vpack.c.b16 %v640, %v639
    %v653 = vpack.c.b16 %v642, %v641
    %v654 = vpack.c.b16 %v644, %v643
    %v655 = vpack.c.b16 %v646, %v645
    %v656 = vpack.c.b16 %v648, %v647
    %665 = vmatpush.bf16.msra.mxu0 %v656
    %666 = vmatpush.bf16.msra.mxu0 %v655
    %667 = vmatpush.bf16.msra.mxu0 %v654
    %668 = vmatpush.bf16.msra.mxu0 %v653
    %669 = vmatpush.bf16.msra.mxu0 %v652
    %670 = vmatpush.bf16.msra.mxu0 %v651
    %671 = vmatpush.bf16.msra.mxu0 %v650
    %672 = vmatpush.bf16.msra.mxu0 %v649
    %673 = vmatmul.bf16.gmra.mxu0 %v595
    %v674 = vpop.f32.mrf.mxu0
    %v675 = vadd.f32 %v615, %v674
    %v676 = vpop.f32.mrf.mxu0
    %v677 = vadd.f32 %v615, %v676
    %678 = vmatmul.bf16.gmra.mxu0 %v596
    %v679 = vpop.f32.mrf.mxu0
    %v680 = vadd.f32 %v615, %v679
    %v681 = vpop.f32.mrf.mxu0
    %v682 = vadd.f32 %v615, %v681
    %683 = vdwg.mxu0
    %v684 = vadd.f32 %v675, %v677
    %v685 = vrot.slane %v684, 4
    %v686 = vadd.f32 %v684, %v685
    %v687 = vrot.slane %v686, 2
    %v688 = vadd.f32 %v686, %v687
    %v689 = vrot.slane %v688, 1
    %v690 = vadd.f32 %v688, %v689
    %v691 = vadd.f32 %v680, %v682
    %v692 = vrot.slane %v691, 4
    %v693 = vadd.f32 %v691, %v692
    %v694 = vrot.slane %v693, 2
    %v695 = vadd.f32 %v693, %v694
    %v696 = vrot.slane %v695, 1
    %v697 = vadd.f32 %v695, %v696
    %v698 = vmul.f32 %v690, %v524
    %v699 = vmul.f32 %v697, %v524
    %v700 = vmul.f32 %v675, %v675
    %v701 = vmul.f32 %v677, %v677
    %v702 = vmul.f32 %v680, %v680
    %v703 = vmul.f32 %v682, %v682
    %v704 = vadd.f32 %v700, %v701
    %v705 = vrot.slane %v704, 4
    %v706 = vadd.f32 %v704, %v705
    %v707 = vrot.slane %v706, 2
    %v708 = vadd.f32 %v706, %v707
    %v709 = vrot.slane %v708, 1
    %v710 = vadd.f32 %v708, %v709
    %v711 = vadd.f32 %v702, %v703
    %v712 = vrot.slane %v711, 4
    %v713 = vadd.f32 %v711, %v712
    %v714 = vrot.slane %v713, 2
    %v715 = vadd.f32 %v713, %v714
    %v716 = vrot.slane %v715, 1
    %v717 = vadd.f32 %v715, %v716
    %v718 = vmul.f32 %v710, %v524
    %v719 = vmul.f32 %v717, %v524
    %v720 = vmul.f32 %v698, %v698
    %v721 = vmul.f32 %v699, %v699
    %v722 = vsub.f32 %v718, %v720
    %v723 = vsub.f32 %v719, %v721
    %v724 = vmax.f32 %v722, 0.0
    %v725 = vmax.f32 %v723, 0.0
    %v726 = vsub.f32 %v675, %v698
    %v727 = vsub.f32 %v677, %v698
    %v728 = vsub.f32 %v680, %v699
    %v729 = vsub.f32 %v682, %v699
    %v730 = vadd.f32 %v724, 1e-05
    %v731 = vadd.f32 %v725, 1e-05
    %v732 = vrsqrt.pop %v730
    %v733 = vmul.f32 %v732, %v730
    %v734 = vmul.f32 %v733, %v732
    %v735 = vmul.f32 0.5, %v734
    %v736 = vsub.f32 1.5, %v735
    %v737 = vmul.f32 %v732, %v736
    %vm738 = vweird.f32 %v730
    %vm739 = vweird.f32 %v732
    %vm740 = vmor %vm738, %vm739
    %v741 = vsel %vm740, %v732, %v737
    %v742 = vrsqrt.pop %v731
    %v743 = vmul.f32 %v742, %v731
    %v744 = vmul.f32 %v743, %v742
    %v745 = vmul.f32 0.5, %v744
    %v746 = vsub.f32 1.5, %v745
    %v747 = vmul.f32 %v742, %v746
    %vm748 = vweird.f32 %v731
    %vm749 = vweird.f32 %v742
    %vm750 = vmor %vm748, %vm749
    %v751 = vsel %vm750, %v742, %v747
    %v752 = vmul.f32 %v726, %v741
    %v753 = vmul.f32 %v727, %v741
    %v754 = vmul.f32 %v728, %v751
    %v755 = vmul.f32 %v729, %v751
    %vm756 = vcmp.ge.f32.partialorder %v752, 0.0
    %vm757 = vcmp.ge.f32.partialorder %v753, 0.0
    %vm758 = vcmp.ge.f32.partialorder %v754, 0.0
    %vm759 = vcmp.ge.f32.partialorder %v755, 0.0
    %v760 = vmul.f32 %v752, 0.2
    %v761 = vmul.f32 %v753, 0.2
    %v762 = vmul.f32 %v754, 0.2
    %v763 = vmul.f32 %v755, 0.2
    %v764 = vsel %vm756, %v752, %v760
    %v765 = vsel %vm757, %v753, %v761
    %v766 = vsel %vm758, %v754, %v762
    %v767 = vsel %vm759, %v755, %v763
    %v768 = vadd.f32 %v764, %v765
    %v769 = vrot.slane %v768, 4
    %v770 = vadd.f32 %v768, %v769
    %v771 = vrot.slane %v770, 2
    %v772 = vadd.f32 %v770, %v771
    %v773 = vrot.slane %v772, 1
    %v774 = vadd.f32 %v772, %v773
    %v775 = vadd.f32 %v766, %v767
    %v776 = vrot.slane %v775, 4
    %v777 = vadd.f32 %v775, %v776
    %v778 = vrot.slane %v777, 2
    %v779 = vadd.f32 %v777, %v778
    %v780 = vrot.slane %v779, 1
    %v781 = vadd.f32 %v779, %v780
    %v782 = vmul.f32 %v774, %v524
    %v783 = vmul.f32 %v781, %v524
    %784 = vst [vmem:[#allocation2] sm:$0x1] %v782
    %785 = vst [vmem:[#allocation2 + $0x1] sm:$0x1] %v783
    // Predicated region
    $region22: #{style_encode_block_forward.3} parent=1 // pred_check
      _
    $region23: #{style_encode_block_forward.3} parent=1 // pred_check_branch
      %787 = sbr.rel (0) target = $region25
    $region24: #{style_encode_block_forward.3} parent=1 // pred_region
      %789 = vsyncadd [#allocation3], 0
      %s790 = sshll.u32 [#allocation2], 4
      %s791 = int_to_ptr.vmem [resolvable:$true] %s790
      %s792 = sshll.u32 %s5, 4
      %s793 = int_to_ptr.hbm [resolvable:$true] %s792
      %798 = dma.vmem_to_hbm [thread:$0]  %s791, 32, %s793, [#allocation3], 16, 16, 1
    $region25: #{style_encode_block_forward.3} parent=1 // pred_fallthru
      _
    // Predicated region
    $region26: #{style_encode_block_forward.3} parent=1 // pred_check
      _
    $region27: #{style_encode_block_forward.3} parent=1 // pred_check_branch
      %800 = sbr.rel (0) target = $region29
    $region28: #{style_encode_block_forward.3} parent=1 // pred_region
      %802 = dma.done [#allocation3], 32
    $region29: #{style_encode_block_forward.3} parent=1 // pred_fallthru
      _
    %803 = vsyncpa [#allocation3], 1

</llo_original>
